<compile_context>
chip_gen: v7x
topology: tpu7x:2x2x1
jax: 0.10.0
libtpu: 0.0.40
codegen_flags: <defaults>
</compile_context>

<pallas_src>
import functools

import jax
import jax.numpy as jnp
import numpy as np
from jax import lax
from jax.experimental import pallas as pl
from jax.experimental.pallas import tpu as pltpu


# ----------------------------- Kernel 1: attention + gate (per-batch) -----------------------------
def attn_gate_kernel(x_ref, m_ref, mask_ref, watt_ref, wgate_ref, o_ref, *, att_size, feat):
    D = feat
    x = x_ref[0]            # (L, D)
    mem = m_ref[0]          # (L, D)
    maskv = mask_ref[0]     # (1, L)  -- memory mask
    L = x.shape[0]

    # Stacked ReLU(Linear) for input and memory: one (2L, D) @ (D, A) matmul.
    xm = jnp.concatenate([x, mem], axis=0)                                   # sublane concat
    proj = jnp.maximum(
        jnp.dot(xm, watt_ref[...], preferred_element_type=jnp.float32), 0.0)  # (2L, A)
    x_p = proj[:L]
    m_p = proj[L:]

    # logits = input_ @ memory_^T / sqrt(attention_size)
    logits = lax.dot_general(x_p, m_p, (((1,), (1,)), ((), ())),
                             preferred_element_type=jnp.float32) * (1.0 / att_size ** 0.5)

    maskb = jnp.broadcast_to(maskv, (L, L))          # broadcast mask over query axis

    # masked_softmax (one-pass form): softmax(logits*mask)*mask renormalized is equal
    # (up to where the 1e-13 eps is applied) to exp(t-max)*mask normalized by its own sum.
    t = logits * maskb
    e = jnp.exp(t - jnp.max(t, axis=-1, keepdims=True)) * maskb
    s = e * pl.reciprocal(jnp.sum(e, axis=-1, keepdims=True) + 1e-13, approx=True)

    ctx = jnp.dot(s, mem, preferred_element_type=jnp.float32)                 # (L, D)

    # Gate without materializing cat = [ctx, x]:
    #   pre = cat @ Wg = ctx @ Wg[:D, :] + x @ Wg[D:, :]
    wg = wgate_ref[...]                                                       # (2D, 2D)
    pre = (jnp.dot(ctx, wg[:D], preferred_element_type=jnp.float32)
           + jnp.dot(x, wg[D:], preferred_element_type=jnp.float32))          # (L, 2D)
    g = jax.nn.sigmoid(pre)

    # output = cat * g, stored in two halves (no concat needed)
    o_ref[0, :, :D] = (ctx * g[:, :D]).astype(o_ref.dtype)
    o_ref[0, :, D:] = (x * g[:, D:]).astype(o_ref.dtype)


# ----------------------------- Kernel 2: bidirectional GRU (time = dim 0) -----------------------------
def bigru_kernel(x_ref, wih_ref, bih_ref,
                 whh_f_ref, bhh_f_ref, whh_b_ref, bhh_b_ref,
                 o_ref, gi_f_ref, gi_b_ref, *, hidden):
    T, N, D2 = x_ref.shape
    H = hidden
    H3 = 3 * H

    # ---- hoisted input projection: one (T*N, D2) @ (D2, 6H) matmul for both directions ----
    x_flat = x_ref[...].reshape(T * N, D2)
    gi_all = jnp.dot(x_flat, wih_ref[...], preferred_element_type=jnp.float32) + bih_ref[...]
    gi_all = gi_all.reshape(T, N, 2 * H3)
    gi_f_ref[...] = gi_all[:, :, :H3]
    gi_b_ref[...] = gi_all[:, :, H3:]

    # ---- loop-invariant weights / biases read once ----
    whh_f = whh_f_ref[...]
    bhh_f = bhh_f_ref[...]
    whh_b = whh_b_ref[...]
    bhh_b = bhh_b_ref[...]

    def cell(gi, h, whh, bhh):
        gh = jnp.dot(h, whh, preferred_element_type=jnp.float32) + bhh   # (N, 3H)
        r = jax.nn.sigmoid(gi[:, 0:H] + gh[:, 0:H])
        z = jax.nn.sigmoid(gi[:, H:2 * H] + gh[:, H:2 * H])
        n = jnp.tanh(gi[:, 2 * H:] + r * gh[:, 2 * H:])
        return (1.0 - z) * n + z * h

    # ---- fused forward + backward recurrence (two independent dependency chains) ----
    def body(t, carry):
        h_f, h_b = carry
        tb = T - 1 - t
        h_f = cell(gi_f_ref[t], h_f, whh_f, bhh_f)
        h_b = cell(gi_b_ref[tb], h_b, whh_b, bhh_b)
        o_ref[t, :, :H] = h_f.astype(o_ref.dtype)
        o_ref[tb, :, H:] = h_b.astype(o_ref.dtype)
        return (h_f, h_b)

    h0 = jnp.zeros((N, H), dtype=jnp.float32)
    lax.fori_loop(0, T, body, (h0, h0))


# ----------------------------- Wrapper -----------------------------
def self_match_encoder(inp, mem, mask, params):
    B, L, D = inp.shape
    A = params["w_att_t"].shape[1]
    H = params["whh_f"].shape[0]
    D2 = 2 * D
    VMEM_LIMIT = 32 * 1024 * 1024

    attn_fn = pl.pallas_call(
        functools.partial(attn_gate_kernel, att_size=A, feat=D),
        out_shape=jax.ShapeDtypeStruct((B, L, D2), jnp.float32),
        grid=(B,),
        in_specs=[
            pl.BlockSpec((1, L, D), lambda b: (b, 0, 0)),
            pl.BlockSpec((1, L, D), lambda b: (b, 0, 0)),
            pl.BlockSpec((1, 1, L), lambda b: (b, 0, 0)),
            pl.BlockSpec((D, A), lambda b: (0, 0)),
            pl.BlockSpec((D2, D2), lambda b: (0, 0)),
        ],
        out_specs=pl.BlockSpec((1, L, D2), lambda b: (b, 0, 0)),
        compiler_params=pltpu.CompilerParams(
            dimension_semantics=("parallel",),
            vmem_limit_bytes=VMEM_LIMIT),
    )
    gated = attn_fn(inp, mem, mask[:, None, :], params["w_att_t"], params["w_gate_t"])

    # nn.GRU(batch_first=False): dim 0 = time, dim 1 = batch
    T, N = B, L
    # combined input-projection weights for both directions (done once, outside the kernel)
    wih = jnp.concatenate([params["wih_f"], params["wih_b"]], axis=1)   # (D2, 6H)
    bih = jnp.concatenate([params["bih_f"], params["bih_b"]], axis=1)   # (1, 6H)

    gru_fn = pl.pallas_call(
        functools.partial(bigru_kernel, hidden=H),
        out_shape=jax.ShapeDtypeStruct((T, N, 2 * H), jnp.float32),
        scratch_shapes=[pltpu.VMEM((T, N, 3 * H), jnp.float32),
                        pltpu.VMEM((T, N, 3 * H), jnp.float32)],
        compiler_params=pltpu.CompilerParams(vmem_limit_bytes=VMEM_LIMIT),
    )
    out = gru_fn(gated, wih, bih,
                 params["whh_f"], params["bhh_f"],
                 params["whh_b"], params["bhh_b"])
    return out                                                  # (B, L, 2H)


# ----------------------------- Pure-JAX reference -----------------------------
def reference(inp, mem, mask, params):
    A = params["w_att_t"].shape[1]
    H = params["whh_f"].shape[0]

    x_p = jax.nn.relu(inp @ params["w_att_t"])
    m_p = jax.nn.relu(mem @ params["w_att_t"])
    logits = jnp.einsum("bld,bmd->blm", x_p, m_p) / (A ** 0.5)
    maskb = jnp.broadcast_to(mask[:, None, :], logits.shape)
    t = logits * maskb
    s = jax.nn.softmax(t, axis=-1)
    s = s * maskb
    s = s / (s.sum(-1, keepdims=True) + 1e-13)
    ctx = jnp.einsum("blm,bmd->bld", s, mem)
    cat = jnp.concatenate([ctx, inp], axis=-1)
    gated = cat * jax.nn.sigmoid(cat @ params["w_gate_t"])

    def cell(x_t, h, wih, whh, bih, bhh):
        gi = x_t @ wih + bih
        gh = h @ whh + bhh
        r = jax.nn.sigmoid(gi[:, :H] + gh[:, :H])
        z = jax.nn.sigmoid(gi[:, H:2 * H] + gh[:, H:2 * H])
        n = jnp.tanh(gi[:, 2 * H:] + r * gh[:, 2 * H:])
        return (1.0 - z) * n + z * h

    T, N, _ = gated.shape
    h = jnp.zeros((N, H), jnp.float32)
    outs_f = []
    for t_ in range(T):
        h = cell(gated[t_], h, params["wih_f"], params["whh_f"], params["bih_f"], params["bhh_f"])
        outs_f.append(h)
    h = jnp.zeros((N, H), jnp.float32)
    outs_b = [None] * T
    for t_ in range(T - 1, -1, -1):
        h = cell(gated[t_], h, params["wih_b"], params["whh_b"], params["bih_b"], params["bhh_b"])
        outs_b[t_] = h
    return jnp.concatenate([jnp.stack(outs_f), jnp.stack(outs_b)], axis=-1)


# ----------------------------- Main -----------------------------
if __name__ == "__main__":
    B, L = 2, 8
    D = 32            # input_size == memory_size (shared input_linear requires it)
    A = 32            # attention_size
    H = 16            # hidden_size, bidirectional=True
    D2 = 2 * D

    key = jax.random.PRNGKey(0)
    ks = jax.random.split(key, 12)

    inp = jax.random.normal(ks[0], (B, L, D), jnp.float32)
    mem = jax.random.normal(ks[1], (B, L, D), jnp.float32)
    mask_np = np.ones((B, L), np.float32)
    mask_np[1, -3:] = 0.0            # second batch has padded memory positions
    mask = jnp.asarray(mask_np)

    sc = 0.1
    params = {
        # attention Linear(D, A, bias=False), stored transposed: y = x @ w_att_t
        "w_att_t": sc * jax.random.normal(ks[2], (D, A), jnp.float32),
        # gate Linear(2D, 2D, bias=False), stored transposed
        "w_gate_t": sc * jax.random.normal(ks[3], (D2, D2), jnp.float32),
        # GRU forward direction (weights transposed to (in, 3H); gate order [r|z|n])
        "wih_f": sc * jax.random.normal(ks[4], (D2, 3 * H), jnp.float32),
        "whh_f": sc * jax.random.normal(ks[5], (H, 3 * H), jnp.float32),
        "bih_f": sc * jax.random.normal(ks[6], (1, 3 * H), jnp.float32),
        "bhh_f": sc * jax.random.normal(ks[7], (1, 3 * H), jnp.float32),
        # GRU backward direction
        "wih_b": sc * jax.random.normal(ks[8], (D2, 3 * H), jnp.float32),
        "whh_b": sc * jax.random.normal(ks[9], (H, 3 * H), jnp.float32),
        "bih_b": sc * jax.random.normal(ks[10], (1, 3 * H), jnp.float32),
        "bhh_b": sc * jax.random.normal(ks[11], (1, 3 * H), jnp.float32),
    }

    out = self_match_encoder(inp, mem, mask, params)
    out = jax.block_until_ready(out)

    ref = jax.block_until_ready(reference(inp, mem, mask, params))
    np.testing.assert_allclose(np.asarray(out), np.asarray(ref), rtol=2e-2, atol=2e-2)
    assert out.shape == (B, L, 2 * H)

    print("KERNEL_OK")
</pallas_src>

<mosaic_0001>
module attributes {stable_mosaic.version = 11 : i64} {
  func.func @attn_gate_kernel(%arg0: i32, %arg1: memref<1x8x32xf32, #tpu.memory_space<vmem>>, %arg2: memref<1x8x32xf32, #tpu.memory_space<vmem>>, %arg3: memref<1x1x8xf32, #tpu.memory_space<vmem>>, %arg4: memref<32x32xf32, #tpu.memory_space<vmem>>, %arg5: memref<64x64xf32, #tpu.memory_space<vmem>>, %arg6: memref<1x8x64xf32, #tpu.memory_space<vmem>>) attributes {dimension_semantics = [#tpu.dimension_semantics<parallel>], iteration_bounds = array<i64: 2>, scalar_prefetch = 0 : i64, scratch_operands = 0 : i64, tpu.core_type = #tpu.core_type<tc>, window_params = [{transform_indices = @transform_0, window_bounds = array<i64: 1, 8, 32>}, {transform_indices = @transform_1, window_bounds = array<i64: 1, 8, 32>}, {transform_indices = @transform_2, window_bounds = array<i64: 1, 1, 8>}, {pipeline_mode = #tpu.pipeline_mode<synchronous>, transform_indices = @transform_3, window_bounds = array<i64: 32, 32>}, {pipeline_mode = #tpu.pipeline_mode<synchronous>, transform_indices = @transform_4, window_bounds = array<i64: 64, 64>}, {transform_indices = @transform_5, window_bounds = array<i64: 1, 8, 64>}]} {
    %c0 = arith.constant 0 : index
    %c0_0 = arith.constant 0 : index
    %c0_1 = arith.constant 0 : index
    %0 = vector.load %arg1[%c0, %c0_0, %c0_1] : memref<1x8x32xf32, #tpu.memory_space<vmem>>, vector<1x8x32xf32>
    %1 = vector.shape_cast %0 : vector<1x8x32xf32> to vector<8x32xf32>
    %c0_2 = arith.constant 0 : index
    %c0_3 = arith.constant 0 : index
    %c0_4 = arith.constant 0 : index
    %2 = vector.load %arg2[%c0_2, %c0_3, %c0_4] : memref<1x8x32xf32, #tpu.memory_space<vmem>>, vector<1x8x32xf32>
    %3 = vector.shape_cast %2 : vector<1x8x32xf32> to vector<8x32xf32>
    %c0_5 = arith.constant 0 : index
    %c0_6 = arith.constant 0 : index
    %c0_7 = arith.constant 0 : index
    %4 = vector.load %arg3[%c0_5, %c0_6, %c0_7] : memref<1x1x8xf32, #tpu.memory_space<vmem>>, vector<1x1x8xf32>
    %5 = vector.shape_cast %4 : vector<1x1x8xf32> to vector<1x8xf32>
    %6 = tpu.concatenate %1, %3 in 0 : vector<8x32xf32>, vector<8x32xf32> -> vector<16x32xf32>
    %c0_8 = arith.constant 0 : index
    %c0_9 = arith.constant 0 : index
    %7 = vector.load %arg4[%c0_8, %c0_9] : memref<32x32xf32, #tpu.memory_space<vmem>>, vector<32x32xf32>
    %cst = arith.constant dense<0.000000e+00> : vector<16x32xf32>
    %8 = tpu.matmul %6, %7, %cst {dimension_numbers = #tpu.dot_dimension_numbers<[1], [0], [0], [1], [0, 0, 1, 1], [], []>} : vector<16x32xf32>, vector<32x32xf32>, vector<16x32xf32> -> vector<16x32xf32>
    %cst_10 = arith.constant 0.000000e+00 : f32
    %9 = vector.broadcast %cst_10 : f32 to vector<16x32xf32>
    %10 = arith.maximumf %8, %9 : vector<16x32xf32>
    %11 = vector.extract_strided_slice %10 {offsets = [0, 0], sizes = [8, 32], strides = [1, 1]} : vector<16x32xf32> to vector<8x32xf32>
    %12 = vector.extract_strided_slice %10 {offsets = [8, 0], sizes = [8, 32], strides = [1, 1]} : vector<16x32xf32> to vector<8x32xf32>
    %cst_11 = arith.constant dense<0.000000e+00> : vector<8x8xf32>
    %13 = tpu.matmul %11, %12, %cst_11 {dimension_numbers = #tpu.dot_dimension_numbers<[1], [1], [0], [0], [0, 0, 1, 0], [], []>} : vector<8x32xf32>, vector<8x32xf32>, vector<8x8xf32> -> vector<8x8xf32>
    %cst_12 = arith.constant 0.176776692 : f32
    %14 = vector.broadcast %cst_12 : f32 to vector<8x8xf32>
    %15 = arith.mulf %13, %14 : vector<8x8xf32>
    %16 = vector.shape_cast %5 : vector<1x8xf32> to vector<1x8xf32>
    %17 = vector.broadcast %16 : vector<1x8xf32> to vector<8x8xf32>
    %18 = arith.mulf %15, %17 : vector<8x8xf32>
    %cst_13 = arith.constant dense<0xFF800000> : vector<8xf32>
    %19 = vector.multi_reduction <maximumf>, %18, %cst_13 [1] : vector<8x8xf32> to vector<8xf32>
    %20 = vector.shape_cast %19 : vector<8xf32> to vector<8x1xf32>
    %21 = vector.broadcast %20 : vector<8x1xf32> to vector<8x8xf32>
    %22 = arith.subf %18, %21 : vector<8x8xf32>
    %23 = math.exp %22 : vector<8x8xf32>
    %24 = arith.mulf %23, %17 : vector<8x8xf32>
    %cst_14 = arith.constant dense<0.000000e+00> : vector<8xf32>
    %25 = vector.multi_reduction <add>, %24, %cst_14 [1] : vector<8x8xf32> to vector<8xf32>
    %26 = vector.shape_cast %25 : vector<8xf32> to vector<8x1xf32>
    %cst_15 = arith.constant 9.99999982E-14 : f32
    %27 = vector.broadcast %cst_15 : f32 to vector<8x1xf32>
    %28 = arith.addf %26, %27 : vector<8x1xf32>
    %29 = tpu.reciprocal %28 {approx = true} : vector<8x1xf32> -> vector<8x1xf32>
    %30 = vector.broadcast %29 : vector<8x1xf32> to vector<8x8xf32>
    %31 = arith.mulf %24, %30 : vector<8x8xf32>
    %cst_16 = arith.constant dense<0.000000e+00> : vector<8x32xf32>
    %32 = tpu.matmul %31, %3, %cst_16 {dimension_numbers = #tpu.dot_dimension_numbers<[1], [0], [0], [1], [0, 0, 1, 1], [], []>} : vector<8x8xf32>, vector<8x32xf32>, vector<8x32xf32> -> vector<8x32xf32>
    %c0_17 = arith.constant 0 : index
    %c0_18 = arith.constant 0 : index
    %33 = vector.load %arg5[%c0_17, %c0_18] : memref<64x64xf32, #tpu.memory_space<vmem>>, vector<64x64xf32>
    %34 = vector.extract_strided_slice %33 {offsets = [0, 0], sizes = [32, 64], strides = [1, 1]} : vector<64x64xf32> to vector<32x64xf32>
    %cst_19 = arith.constant dense<0.000000e+00> : vector<8x64xf32>
    %35 = tpu.matmul %32, %34, %cst_19 {dimension_numbers = #tpu.dot_dimension_numbers<[1], [0], [0], [1], [0, 0, 1, 1], [], []>} : vector<8x32xf32>, vector<32x64xf32>, vector<8x64xf32> -> vector<8x64xf32>
    %36 = vector.extract_strided_slice %33 {offsets = [32, 0], sizes = [32, 64], strides = [1, 1]} : vector<64x64xf32> to vector<32x64xf32>
    %cst_20 = arith.constant dense<0.000000e+00> : vector<8x64xf32>
    %37 = tpu.matmul %1, %36, %cst_20 {dimension_numbers = #tpu.dot_dimension_numbers<[1], [0], [0], [1], [0, 0, 1, 1], [], []>} : vector<8x32xf32>, vector<32x64xf32>, vector<8x64xf32> -> vector<8x64xf32>
    %38 = arith.addf %35, %37 : vector<8x64xf32>
    %39 = arith.negf %38 : vector<8x64xf32>
    %40 = math.exp %39 : vector<8x64xf32>
    %cst_21 = arith.constant 1.000000e+00 : f32
    %41 = vector.broadcast %cst_21 : f32 to vector<8x64xf32>
    %42 = arith.addf %41, %40 : vector<8x64xf32>
    %43 = arith.divf %41, %42 : vector<8x64xf32>
    %44 = vector.extract_strided_slice %43 {offsets = [0, 0], sizes = [8, 32], strides = [1, 1]} : vector<8x64xf32> to vector<8x32xf32>
    %45 = arith.mulf %32, %44 : vector<8x32xf32>
    %c0_22 = arith.constant 0 : index
    %c0_23 = arith.constant 0 : index
    %c0_24 = arith.constant 0 : index
    %46 = vector.load %arg6[%c0_22, %c0_23, %c0_24] : memref<1x8x64xf32, #tpu.memory_space<vmem>>, vector<1x8x32xf32>
    %47 = vector.shape_cast %46 : vector<1x8x32xf32> to vector<8x32xf32>
    %48 = vector.shape_cast %45 : vector<8x32xf32> to vector<1x8x32xf32>
    tpu.vector_store %arg6[%c0_22, %c0_23, %c0_24], %48 {strides = array<i32>} : memref<1x8x64xf32, #tpu.memory_space<vmem>>, vector<1x8x32xf32>,
    %49 = vector.extract_strided_slice %43 {offsets = [0, 32], sizes = [8, 32], strides = [1, 1]} : vector<8x64xf32> to vector<8x32xf32>
    %50 = arith.mulf %1, %49 : vector<8x32xf32>
    %c0_25 = arith.constant 0 : index
    %c0_26 = arith.constant 0 : index
    %c32 = arith.constant 32 : index
    %51 = vector.load %arg6[%c0_25, %c0_26, %c32] : memref<1x8x64xf32, #tpu.memory_space<vmem>>, vector<1x8x32xf32>
    %52 = vector.shape_cast %51 : vector<1x8x32xf32> to vector<8x32xf32>
    %53 = vector.shape_cast %50 : vector<8x32xf32> to vector<1x8x32xf32>
    tpu.vector_store %arg6[%c0_25, %c0_26, %c32], %53 {strides = array<i32>} : memref<1x8x64xf32, #tpu.memory_space<vmem>>, vector<1x8x32xf32>,
    return
  }
  func.func @transform_0(%arg0: i32) -> (i32, i32, i32) {
    %c0_i32 = arith.constant 0 : i32
    %c0_i32_0 = arith.constant 0 : i32
    %c0_i32_1 = arith.constant 0 : i32
    return %arg0, %c0_i32, %c0_i32_0 : i32, i32, i32
  }
  func.func @transform_1(%arg0: i32) -> (i32, i32, i32) {
    %c0_i32 = arith.constant 0 : i32
    %c0_i32_0 = arith.constant 0 : i32
    %c0_i32_1 = arith.constant 0 : i32
    return %arg0, %c0_i32, %c0_i32_0 : i32, i32, i32
  }
  func.func @transform_2(%arg0: i32) -> (i32, i32, i32) {
    %c0_i32 = arith.constant 0 : i32
    %c0_i32_0 = arith.constant 0 : i32
    %c0_i32_1 = arith.constant 0 : i32
    return %arg0, %c0_i32, %c0_i32_0 : i32, i32, i32
  }
  func.func @transform_3(%arg0: i32) -> (i32, i32) {
    %c0_i32 = arith.constant 0 : i32
    %c0_i32_0 = arith.constant 0 : i32
    %c0_i32_1 = arith.constant 0 : i32
    return %c0_i32, %c0_i32_0 : i32, i32
  }
  func.func @transform_4(%arg0: i32) -> (i32, i32) {
    %c0_i32 = arith.constant 0 : i32
    %c0_i32_0 = arith.constant 0 : i32
    %c0_i32_1 = arith.constant 0 : i32
    return %c0_i32, %c0_i32_0 : i32, i32
  }
  func.func @transform_5(%arg0: i32) -> (i32, i32, i32) {
    %c0_i32 = arith.constant 0 : i32
    %c0_i32_0 = arith.constant 0 : i32
    %c0_i32_1 = arith.constant 0 : i32
    return %arg0, %c0_i32, %c0_i32_0 : i32, i32, i32
  }
}

</mosaic_0001>

<llo_original>
// kernel: tpu_custom_call.1
$region0: #{tpu_custom_call.1}
  #allocation0 [shape = 'u32[]', space=smem, size = 0x4, offset = 0x4, fixed_abs, tag = 'smem constant byte address 0x4 - core index']
  #allocation1 [shape = 'u32[144,128]{1,0:T(1,128)}', space=vmem, size = 0x12000, scoped, tag = 'internal scratch']
  %s0 = inlined_call_operand.hbm [shape: f32[2,8,32], index: 0, kind: input, shape index: {}]
  %s1 = inlined_call_operand.hbm [shape: f32[2,8,32], index: 1, kind: input, shape index: {}]
  %s2 = inlined_call_operand.vmem [shape: f32[2,1,8], index: 2, kind: input, shape index: {}]
  %s3 = inlined_call_operand.hbm [shape: f32[32,32], index: 3, kind: input, shape index: {}]
  %s4 = inlined_call_operand.hbm [shape: f32[64,64], index: 4, kind: input, shape index: {}]
  %s5 = inlined_call_operand.hbm [shape: f32[2,8,64], index: 5, kind: output, shape index: {}]
  %s6 = sld [smem:[#allocation0]]
  $region69: #{tpu_custom_call.1} parent=0
    _
  %s8 = ssub.s32 1, %s6
  %s9 = scalar_select 0, %s8, %s6
  $region1: #{tpu_custom_call.1} parent=0
    #allocation2 [shape = 'u8[8192]{0}', space=vmem, size = 0x2000, scoped, tag = 'input window, operand 0']
    #allocation3 [shape = 's32[2]{0}', space=sflag, size = 0x8, scoped, tag = 'scoped memory for tpu_custom_call.1']
    #allocation4 [shape = 's32[2]{0}', space=sflag, size = 0x8, scoped, tag = 'scoped memory for tpu_custom_call.1']
    #allocation5 [shape = 'u8[8192]{0}', space=vmem, size = 0x2000, scoped, tag = 'input window, operand 1']
    #allocation6 [shape = 's32[2]{0}', space=sflag, size = 0x8, scoped, tag = 'scoped memory for tpu_custom_call.1']
    #allocation7 [shape = 'u8[16384]{0}', space=vmem, size = 0x4000, scoped, tag = 'input window, operand 3, single buffered']
    #allocation8 [shape = 'u8[32768]{0}', space=vmem, size = 0x8000, scoped, tag = 'input window, operand 4, single buffered']
    #allocation9 [shape = 's32[1]{0}', space=sflag, size = 0x4, scoped, tag = 'scoped memory for tpu_custom_call.1']
    #allocation10 [shape = 'u8[8192]{0}', space=vmem, size = 0x2000, scoped, tag = 'output window, operand 0']
    %10 = vsyncpa [#allocation3], 0
    %s11 = scalar_lea.sflag [#allocation3], 1
    %12 = vsyncpa %s11, 0
    %13 = vsyncpa [#allocation6], 0
    %s14 = scalar_lea.sflag [#allocation6], 1
    %15 = vsyncpa %s14, 0
    %16 = vsyncpa [#allocation9], 0
    %17 = vsyncpa [#allocation4], 0
    %s18 = scalar_lea.sflag [#allocation4], 1
    %19 = vsyncpa %s18, 0
    loop: start=0, step=1, limit=4
    $region2: #{tpu_custom_call.1} parent=1 // loop_pre_header
      _
    $region3: #{tpu_custom_call.1} parent=1 // loop_header
      %s21 = sphi 0, %s25
      %p22 = scmp.ge.s32.totalorder %s21, 4
      %s31 = sphi 0, %s33
      %s34 = sphi 0, %s31
      %s35 = sphi 0, %s34
      %s51 = sphi 0, %s35
      %s57 = sphi 0, %s59
      %s60 = sphi 0, %s57
      %s61 = sphi 0, %s60
      %s77 = sphi 0, %s61
      %s83 = sphi 0, %s85
      %s86 = sphi 0, %s83
      %s87 = sphi 0, %s86
      %s103 = sphi 0, %s87
      %s107 = sphi 0, %s107
      %s109 = sphi 0, %s107
      %s110 = sphi 0, %s109
      %s124 = sphi 0, %s110
      %s128 = sphi 0, %s128
      %s130 = sphi 0, %s128
      %s131 = sphi 0, %s130
      %s145 = sphi 0, %s131
      %s151 = sphi 0, %s153
      %s154 = sphi 0, %s151
      %s155 = sphi 0, %s154
      %s171 = sphi 0, %s155
    $region4: #{tpu_custom_call.1} parent=1 // loop_header_branch
      %24 = sbr.rel (%p22) target = $region8
    $region5: #{tpu_custom_call.1} parent=1 // loop_body
      %s26 = ssub.s32 %s21, 1
      %s27 = ssub.s32 %s21, 2
      %s28 = sadd.s32 %s21, 1
      %s29 = ssub.s32 %s21, %s28
      %p30 = scmp.eq.s32.totalorder %s29, 0
      %s32 = sadd.s32 %s31, 1
      %s33 = scalar_select %p30, %s31, %s32
      %p36 = pneg %p30
      %p37 = scmp.eq.s32.totalorder %s21, 1
      %p38 = por %p36, %p37
      %p39 = scmp.ne.s32.totalorder %s31, %s34
      %p40 = scmp.eq.s32.totalorder %s21, 0
      %p41 = por %p39, %p40
      %p42 = scmp.ne.s32.totalorder %s31, %s34
      %p43 = scmp.eq.s32.totalorder %s26, 1
      %p44 = por %p42, %p43
      %p45 = scmp.ne.s32.totalorder %s34, %s35
      %p46 = scmp.eq.s32.totalorder %s26, 0
      %p47 = por %p45, %p46
      %p48 = scmp.ne.s32.totalorder %s34, %s35
      %p49 = scmp.eq.s32.totalorder %s27, 1
      %p50 = por %p48, %p49
      %p52 = scmp.ne.s32.totalorder %s35, %s51
      %p53 = scmp.eq.s32.totalorder %s27, 0
      %p54 = por %p52, %p53
      %s55 = ssub.s32 %s21, %s28
      %p56 = scmp.eq.s32.totalorder %s55, 0
      %s58 = sadd.s32 %s57, 1
      %s59 = scalar_select %p56, %s57, %s58
      %p62 = pneg %p56
      %p63 = scmp.eq.s32.totalorder %s21, 1
      %p64 = por %p62, %p63
      %p65 = scmp.ne.s32.totalorder %s57, %s60
      %p66 = scmp.eq.s32.totalorder %s21, 0
      %p67 = por %p65, %p66
      %p68 = scmp.ne.s32.totalorder %s57, %s60
      %p69 = scmp.eq.s32.totalorder %s26, 1
      %p70 = por %p68, %p69
      %p71 = scmp.ne.s32.totalorder %s60, %s61
      %p72 = scmp.eq.s32.totalorder %s26, 0
      %p73 = por %p71, %p72
      %p74 = scmp.ne.s32.totalorder %s60, %s61
      %p75 = scmp.eq.s32.totalorder %s27, 1
      %p76 = por %p74, %p75
      %p78 = scmp.ne.s32.totalorder %s61, %s77
      %p79 = scmp.eq.s32.totalorder %s27, 0
      %p80 = por %p78, %p79
      %s81 = ssub.s32 %s21, %s28
      %p82 = scmp.eq.s32.totalorder %s81, 0
      %s84 = sadd.s32 %s83, 1
      %s85 = scalar_select %p82, %s83, %s84
      %p88 = pneg %p82
      %p89 = scmp.eq.s32.totalorder %s21, 1
      %p90 = por %p88, %p89
      %p91 = scmp.ne.s32.totalorder %s83, %s86
      %p92 = scmp.eq.s32.totalorder %s21, 0
      %p93 = por %p91, %p92
      %p94 = scmp.ne.s32.totalorder %s83, %s86
      %p95 = scmp.eq.s32.totalorder %s26, 1
      %p96 = por %p94, %p95
      %p97 = scmp.ne.s32.totalorder %s86, %s87
      %p98 = scmp.eq.s32.totalorder %s26, 0
      %p99 = por %p97, %p98
      %p100 = scmp.ne.s32.totalorder %s86, %s87
      %p101 = scmp.eq.s32.totalorder %s27, 1
      %p102 = por %p100, %p101
      %p104 = scmp.ne.s32.totalorder %s87, %s103
      %p105 = scmp.eq.s32.totalorder %s27, 0
      %p106 = por %p104, %p105
      %s108 = sadd.s32 %s107, 1
      %p111 = scmp.eq.s32.totalorder %s21, 1
      %p112 = scmp.ne.s32.totalorder %s107, %s109
      %p113 = scmp.eq.s32.totalorder %s21, 0
      %p114 = por %p112, %p113
      %p115 = scmp.ne.s32.totalorder %s107, %s109
      %p116 = scmp.eq.s32.totalorder %s26, 1
      %p117 = por %p115, %p116
      %p118 = scmp.ne.s32.totalorder %s109, %s110
      %p119 = scmp.eq.s32.totalorder %s26, 0
      %p120 = por %p118, %p119
      %p121 = scmp.ne.s32.totalorder %s109, %s110
      %p122 = scmp.eq.s32.totalorder %s27, 1
      %p123 = por %p121, %p122
      %p125 = scmp.ne.s32.totalorder %s110, %s124
      %p126 = scmp.eq.s32.totalorder %s27, 0
      %p127 = por %p125, %p126
      %s129 = sadd.s32 %s128, 1
      %p132 = scmp.eq.s32.totalorder %s21, 1
      %p133 = scmp.ne.s32.totalorder %s128, %s130
      %p134 = scmp.eq.s32.totalorder %s21, 0
      %p135 = por %p133, %p134
      %p136 = scmp.ne.s32.totalorder %s128, %s130
      %p137 = scmp.eq.s32.totalorder %s26, 1
      %p138 = por %p136, %p137
      %p139 = scmp.ne.s32.totalorder %s130, %s131
      %p140 = scmp.eq.s32.totalorder %s26, 0
      %p141 = por %p139, %p140
      %p142 = scmp.ne.s32.totalorder %s130, %s131
      %p143 = scmp.eq.s32.totalorder %s27, 1
      %p144 = por %p142, %p143
      %p146 = scmp.ne.s32.totalorder %s131, %s145
      %p147 = scmp.eq.s32.totalorder %s27, 0
      %p148 = por %p146, %p147
      %s149 = ssub.s32 %s21, %s28
      %p150 = scmp.eq.s32.totalorder %s149, 0
      %s152 = sadd.s32 %s151, 1
      %s153 = scalar_select %p150, %s151, %s152
      %p156 = pneg %p150
      %p157 = scmp.eq.s32.totalorder %s21, 1
      %p158 = por %p156, %p157
      %p159 = scmp.ne.s32.totalorder %s151, %s154
      %p160 = scmp.eq.s32.totalorder %s21, 0
      %p161 = por %p159, %p160
      %p162 = scmp.ne.s32.totalorder %s151, %s154
      %p163 = scmp.eq.s32.totalorder %s26, 1
      %p164 = por %p162, %p163
      %p165 = scmp.ne.s32.totalorder %s154, %s155
      %p166 = scmp.eq.s32.totalorder %s26, 0
      %p167 = por %p165, %p166
      %p168 = scmp.ne.s32.totalorder %s154, %s155
      %p169 = scmp.eq.s32.totalorder %s27, 1
      %p170 = por %p168, %p169
      %p172 = scmp.ne.s32.totalorder %s155, %s171
      %p173 = scmp.eq.s32.totalorder %s27, 0
      %p174 = por %p172, %p173
      %p175 = scmp.le.s32.totalorder 1, %s21
      %p176 = scmp.lt.s32.totalorder %s21, 3
      %p177 = pnand %p175, %p176
      %p178 = pneg %p177
      // Predicated region
      $region9: #{tpu_custom_call.1} parent=5 // pred_check
        _
      $region10: #{tpu_custom_call.1} parent=5 // pred_check_branch
        %180 = sbr.rel (%p177) target = $region12
      $region11: #{tpu_custom_call.1} parent=5 // pred_region
        %s181 = ssub.s32 %s21, 1
        // Predicated region
        $region13: #{tpu_custom_call.1} parent=11 // pred_check
          %p182 = pneg %p120
        $region14: #{tpu_custom_call.1} parent=11 // pred_check_branch
          %184 = sbr.rel (%p182) target = $region16
        $region15: #{tpu_custom_call.1} parent=11 // pred_region
          %s186 = ssub.s32 512, 512
          %187 = vsyncadd [#allocation6], %s186
          %s188 = sshll.u32 [#allocation7], 4
          %s189 = int_to_ptr.vmem [resolvable:$true] %s188
          %194 = dma.hbm_to_vmem [thread:$0]  %s3, 512, %s189, [#allocation6], 128, 128, 8
        $region16: #{tpu_custom_call.1} parent=11 // pred_fallthru
          _
        // Predicated region
        $region17: #{tpu_custom_call.1} parent=11 // pred_check
          %p195 = pneg %p141
        $region18: #{tpu_custom_call.1} parent=11 // pred_check_branch
          %197 = sbr.rel (%p195) target = $region20
        $region19: #{tpu_custom_call.1} parent=11 // pred_region
          %s199 = ssub.s32 1024, 1024
          %200 = vsyncadd [#allocation9], %s199
          %s201 = sshll.u32 [#allocation8], 4
          %s202 = int_to_ptr.vmem [resolvable:$true] %s201
          %207 = dma.hbm_to_vmem [thread:$0]  %s4, 1024, %s202, [#allocation9], 128, 128, 8
        $region20: #{tpu_custom_call.1} parent=11 // pred_fallthru
          _
      $region12: #{tpu_custom_call.1} parent=5 // pred_fallthru
        _
      %p208 = scmp.lt.s32.totalorder %s21, 2
      // Predicated region
      $region21: #{tpu_custom_call.1} parent=5 // pred_check
        %p209 = pneg %p208
      $region22: #{tpu_custom_call.1} parent=5 // pred_check_branch
        %211 = sbr.rel (%p209) target = $region24
      $region23: #{tpu_custom_call.1} parent=5 // pred_region
        // Predicated region
        $region25: #{tpu_custom_call.1} parent=23 // pred_check
          %p212 = pneg %p41
        $region26: #{tpu_custom_call.1} parent=23 // pred_check_branch
          %214 = sbr.rel (%p212) target = $region28
        $region27: #{tpu_custom_call.1} parent=23 // pred_region
          %s215 = sand.u32 %s31, 1
          %s216 = scalar_lea.sflag [#allocation3], %s215
          %s217 = sand.u32 %s31, 1
          %s218 = smul.addr %s217, 8
          %s219 = scalar_lea.vmem [#allocation2], %s218
          %s221 = ssub.s32 128, 128
          %222 = vsyncadd %s216, %s221
          %s223 = smul.addr %s21, 128
          %s224 = scalar_lea.hbm %s0, %s223
          %s226 = sshll.u32 %s219, 4
          %s227 = int_to_ptr.vmem [resolvable:$true] %s226
          %229 = dma.hbm_to_vmem [thread:$0]  %s224, 128, %s227, %s216
        $region28: #{tpu_custom_call.1} parent=23 // pred_fallthru
          _
        // Predicated region
        $region29: #{tpu_custom_call.1} parent=23 // pred_check
          %p230 = pneg %p67
        $region30: #{tpu_custom_call.1} parent=23 // pred_check_branch
          %232 = sbr.rel (%p230) target = $region32
        $region31: #{tpu_custom_call.1} parent=23 // pred_region
          %s233 = sand.u32 %s21, 1
          %s234 = scalar_lea.sflag [#allocation6], %s233
          %s235 = sand.u32 %s57, 1
          %s236 = smul.addr %s235, 8
          %s237 = scalar_lea.vmem [#allocation5], %s236
          %s239 = ssub.s32 128, 128
          %240 = vsyncadd %s234, %s239
          %s241 = smul.addr %s21, 128
          %s242 = scalar_lea.hbm %s1, %s241
          %s244 = sshll.u32 %s237, 4
          %s245 = int_to_ptr.vmem [resolvable:$true] %s244
          %247 = dma.hbm_to_vmem [thread:$0]  %s242, 128, %s245, %s234
        $region32: #{tpu_custom_call.1} parent=23 // pred_fallthru
          _
        // Predicated region
        $region33: #{tpu_custom_call.1} parent=23 // pred_check
          %p248 = pneg %p93
        $region34: #{tpu_custom_call.1} parent=23 // pred_check_branch
          %250 = sbr.rel (%p248) target = $region36
        $region35: #{tpu_custom_call.1} parent=23 // pred_region
          %p251 = scmp.lt.s32.totalorder %s21, 1
          %s252 = scalar_select %p251, %s21, 1
          %s253 = scalar_lea.vmem %s2, %s252
        $region36: #{tpu_custom_call.1} parent=23 // pred_fallthru
          _
      $region24: #{tpu_custom_call.1} parent=5 // pred_fallthru
        _
      %p254 = scmp.le.s32.totalorder 1, %s21
      %p255 = scmp.lt.s32.totalorder %s21, 3
      %p256 = pnand %p254, %p255
      %p257 = pneg %p256
      // Predicated region
      $region37: #{tpu_custom_call.1} parent=5 // pred_check
        _
      $region38: #{tpu_custom_call.1} parent=5 // pred_check_branch
        %259 = sbr.rel (%p256) target = $region40
      $region39: #{tpu_custom_call.1} parent=5 // pred_region
        %s260 = ssub.s32 %s21, 1
        %s261 = sand.u32 %s34, 1
        %s262 = scalar_lea.sflag [#allocation3], %s261
        %s263 = sand.u32 %s34, 1
        %s264 = smul.addr %s263, 8
        %s265 = scalar_lea.vmem [#allocation2], %s264
        // Predicated region
        $region41: #{tpu_custom_call.1} parent=39 // pred_check
          %p266 = pneg %p47
        $region42: #{tpu_custom_call.1} parent=39 // pred_check_branch
          %268 = sbr.rel (%p266) target = $region44
        $region43: #{tpu_custom_call.1} parent=39 // pred_region
          %269 = dma.done %s262, 128
        $region44: #{tpu_custom_call.1} parent=39 // pred_fallthru
          _
        %s270 = sand.u32 %s26, 1
        %s271 = scalar_lea.sflag [#allocation6], %s270
        %s272 = sand.u32 %s60, 1
        %s273 = smul.addr %s272, 8
        %s274 = scalar_lea.vmem [#allocation5], %s273
        // Predicated region
        $region45: #{tpu_custom_call.1} parent=39 // pred_check
          %p275 = pneg %p73
        $region46: #{tpu_custom_call.1} parent=39 // pred_check_branch
          %277 = sbr.rel (%p275) target = $region48
        $region47: #{tpu_custom_call.1} parent=39 // pred_region
          %278 = dma.done %s271, 128
        $region48: #{tpu_custom_call.1} parent=39 // pred_fallthru
          _
        // Predicated region
        $region49: #{tpu_custom_call.1} parent=39 // pred_check
          %p279 = pneg %p120
        $region50: #{tpu_custom_call.1} parent=39 // pred_check_branch
          %281 = sbr.rel (%p279) target = $region52
        $region51: #{tpu_custom_call.1} parent=39 // pred_region
          %282 = dma.done [#allocation6], 512
        $region52: #{tpu_custom_call.1} parent=39 // pred_fallthru
          _
        // Predicated region
        $region53: #{tpu_custom_call.1} parent=39 // pred_check
          %p283 = pneg %p141
        $region54: #{tpu_custom_call.1} parent=39 // pred_check_branch
          %285 = sbr.rel (%p283) target = $region56
        $region55: #{tpu_custom_call.1} parent=39 // pred_region
          %286 = dma.done [#allocation9], 1024
        $region56: #{tpu_custom_call.1} parent=39 // pred_fallthru
          _
        %s287 = sand.u32 %s34, 1
        %s288 = scalar_lea.sflag [#allocation3], %s287
        %s289 = sand.u32 %s34, 1
        %s290 = smul.addr %s289, 8
        %s291 = scalar_lea.vmem [#allocation2], %s290
        %p292 = pneg %p47
        %p293 = pneg %p44
        %s294 = sand.u32 %s26, 1
        %s295 = scalar_lea.sflag [#allocation6], %s294
        %s296 = sand.u32 %s60, 1
        %s297 = smul.addr %s296, 8
        %s298 = scalar_lea.vmem [#allocation5], %s297
        %p299 = pneg %p73
        %p300 = pneg %p70
        %p301 = scmp.lt.s32.totalorder %s26, 1
        %s302 = scalar_select %p301, %s26, 1
        %s303 = scalar_lea.vmem %s2, %s302
        %p304 = pneg %p99
        %p305 = pneg %p96
        %p306 = pneg %p120
        %p307 = pneg %p117
        %p308 = pneg %p141
        %p309 = pneg %p138
        %p310 = pneg %p167
        %p311 = pneg %p164
        %s312 = sand.u32 %s154, 1
        %s313 = scalar_lea.sflag [#allocation4], %s312
        %s314 = sand.u32 %s154, 1
        %s315 = smul.addr %s314, 8
        %s316 = scalar_lea.vmem [#allocation10], %s315
        %p317 = scmp.lt.s32.totalorder %s26, 1
        %s318 = scalar_select %p317, %s26, 1
        %s319 = scalar_lea.vmem %s2, %s318
        %v320 = vld [vmem:[%s265] sm:$0xff]
        %v321 = vld [vmem:[%s274] sm:$0xff]
        %v322 = vld [vmem:[%s319] sm:$0x1]
        %v323 = vld [vmem:[#allocation7] sm:$0xff]
        %v324 = vld [vmem:[#allocation7 + $0x8] sm:$0xff]
        %v325 = vld [vmem:[#allocation7 + $0x10] sm:$0xff]
        %v326 = vld [vmem:[#allocation7 + $0x18] sm:$0xff]
        %vm327 = vcmask 261120
        %v329 = vsel %vm327, %v320, 0
        %v332 = vsel %vm327, %v321, 0
        %334 = vmatprep.subr.mxu0 0.0
        %335 = vmatpush1.msra.mxu0 %v323
        %336 = vmatprep.subr.mxu0 0.0
        %337 = vmatpush1.msra.mxu0 %v324
        %338 = vmatprep.subr.mxu0 0.0
        %339 = vmatpush1.msra.mxu0 %v325
        %340 = vmatprep.subr.mxu0 0.0
        %341 = vmatpush1.msra.mxu0 %v326
        %342 = vmatprep.subr.mxu0 0.0
        %343 = vmatpush1.msra.mxu0 0.0
        %344 = vmatprep.subr.mxu0 0.0
        %345 = vmatpush1.msra.mxu0 0.0
        %346 = vmatprep.subr.mxu0 0.0
        %347 = vmatpush1.msra.mxu0 0.0
        %348 = vmatprep.subr.mxu0 0.0
        %349 = vmatpush1.msra.mxu0 0.0
        %350 = vmatprep.subr.mxu0 0.0
        %351 = vmatpush1.msra.mxu0 0.0
        %352 = vmatprep.subr.mxu0 0.0
        %353 = vmatpush1.msra.mxu0 0.0
        %354 = vmatprep.subr.mxu0 0.0
        %355 = vmatpush1.msra.mxu0 0.0
        %356 = vmatprep.subr.mxu0 0.0
        %357 = vmatpush1.msra.mxu0 0.0
        %358 = vmatprep.subr.mxu0 0.0
        %359 = vmatpush1.msra.mxu0 0.0
        %360 = vmatprep.subr.mxu0 0.0
        %361 = vmatpush1.msra.mxu0 0.0
        %362 = vmatprep.subr.mxu0 0.0
        %363 = vmatpush1.msra.mxu0 0.0
        %364 = vmatprep.subr.mxu0 0.0
        %365 = vmatpush1.msra.mxu0 0.0
        %366 = vmatprep.subr.mxu0 0.0
        %367 = vmatpush1.msra.mxu0 0.0
        %368 = vmatprep.subr.mxu0 0.0
        %369 = vmatpush1.msra.mxu0 0.0
        %370 = vmatprep.subr.mxu0 0.0
        %371 = vmatpush1.msra.mxu0 0.0
        %372 = vmatprep.subr.mxu0 0.0
        %373 = vmatpush1.msra.mxu0 0.0
        %374 = vmatprep.subr.mxu0 0.0
        %375 = vmatpush1.msra.mxu0 0.0
        %376 = vmatprep.subr.mxu0 0.0
        %377 = vmatpush1.msra.mxu0 0.0
        %378 = vmatprep.subr.mxu0 0.0
        %379 = vmatpush1.msra.mxu0 0.0
        %380 = vmatprep.subr.mxu0 0.0
        %381 = vmatpush1.msra.mxu0 0.0
        %382 = vmatprep.subr.mxu0 0.0
        %383 = vmatpush1.msra.mxu0 0.0
        %384 = vmatprep.subr.mxu0 0.0
        %385 = vmatpush1.msra.mxu0 0.0
        %386 = vmatprep.subr.mxu0 0.0
        %387 = vmatpush1.msra.mxu0 0.0
        %388 = vmatprep.subr.mxu0 0.0
        %389 = vmatpush1.msra.mxu0 0.0
        %390 = vmatprep.subr.mxu0 0.0
        %391 = vmatpush1.msra.mxu0 0.0
        %392 = vmatprep.subr.mxu0 0.0
        %393 = vmatpush1.msra.mxu0 0.0
        %394 = vmatprep.subr.mxu0 0.0
        %395 = vmatpush1.msra.mxu0 0.0
        %396 = vmatprep.subr.mxu0 0.0
        %397 = vmatpush1.msra.mxu0 0.0
        %398 = vmatprep.mubr.f32.mxu0 0.0
        %399 = vmatmul.mubr.f32.gmra.mrb[0].mxu0 %v329
        %v400 = vpop.f32.mrb[0].mxu0
        %v401 = vadd.f32 0.0, %v400
        %v402 = vpop.f32.mrb[0].mxu0
        %403 = vmatprep.mubr.f32.mxu0 0.0
        %404 = vmatmul.mubr.f32.gmra.mrb[0].mxu0 %v332
        %v405 = vpop.f32.mrb[0].mxu0
        %v406 = vadd.f32 0.0, %v405
        %v407 = vpop.f32.mrb[0].mxu0
        %408 = vdwg.mxu0
        %v409 = vmax.f32 %v401, 0.0
        %v410 = vmax.f32 %v406, 0.0
        %v412 = vsel %vm327, %v409, 0
        %v415 = vsel %vm327, %v410, 0
        %417 = vmatprep.subr.mxu0 0.0
        %418 = vmatpush1.xpose.msra.mxu0 %v415
        %419 = vmatprep.subr.mxu0 0.0
        %420 = vmatpush1.xpose.msra.mxu0 0.0
        %421 = vmatprep.subr.mxu0 0.0
        %422 = vmatpush1.xpose.msra.mxu0 0.0
        %423 = vmatprep.subr.mxu0 0.0
        %424 = vmatpush1.xpose.msra.mxu0 0.0
        %425 = vmatprep.subr.mxu0 0.0
        %426 = vmatpush1.xpose.msra.mxu0 0.0
        %427 = vmatprep.subr.mxu0 0.0
        %428 = vmatpush1.xpose.msra.mxu0 0.0
        %429 = vmatprep.subr.mxu0 0.0
        %430 = vmatpush1.xpose.msra.mxu0 0.0
        %431 = vmatprep.subr.mxu0 0.0
        %432 = vmatpush1.xpose.msra.mxu0 0.0
        %433 = vmatprep.subr.mxu0 0.0
        %434 = vmatpush1.xpose.msra.mxu0 0.0
        %435 = vmatprep.subr.mxu0 0.0
        %436 = vmatpush1.xpose.msra.mxu0 0.0
        %437 = vmatprep.subr.mxu0 0.0
        %438 = vmatpush1.xpose.msra.mxu0 0.0
        %439 = vmatprep.subr.mxu0 0.0
        %440 = vmatpush1.xpose.msra.mxu0 0.0
        %441 = vmatprep.subr.mxu0 0.0
        %442 = vmatpush1.xpose.msra.mxu0 0.0
        %443 = vmatprep.subr.mxu0 0.0
        %444 = vmatpush1.xpose.msra.mxu0 0.0
        %445 = vmatprep.subr.mxu0 0.0
        %446 = vmatpush1.xpose.msra.mxu0 0.0
        %447 = vmatprep.subr.mxu0 0.0
        %448 = vmatpush1.xpose.msra.mxu0 0.0
        %449 = vmatprep.subr.mxu0 0.0
        %450 = vmatpush1.xpose.msra.mxu0 0.0
        %451 = vmatprep.subr.mxu0 0.0
        %452 = vmatpush1.xpose.msra.mxu0 0.0
        %453 = vmatprep.subr.mxu0 0.0
        %454 = vmatpush1.xpose.msra.mxu0 0.0
        %455 = vmatprep.subr.mxu0 0.0
        %456 = vmatpush1.xpose.msra.mxu0 0.0
        %457 = vmatprep.subr.mxu0 0.0
        %458 = vmatpush1.xpose.msra.mxu0 0.0
        %459 = vmatprep.subr.mxu0 0.0
        %460 = vmatpush1.xpose.msra.mxu0 0.0
        %461 = vmatprep.subr.mxu0 0.0
        %462 = vmatpush1.xpose.msra.mxu0 0.0
        %463 = vmatprep.subr.mxu0 0.0
        %464 = vmatpush1.xpose.msra.mxu0 0.0
        %465 = vmatprep.subr.mxu0 0.0
        %466 = vmatpush1.xpose.msra.mxu0 0.0
        %467 = vmatprep.subr.mxu0 0.0
        %468 = vmatpush1.xpose.msra.mxu0 0.0
        %469 = vmatprep.subr.mxu0 0.0
        %470 = vmatpush1.xpose.msra.mxu0 0.0
        %471 = vmatprep.subr.mxu0 0.0
        %472 = vmatpush1.xpose.msra.mxu0 0.0
        %473 = vmatprep.subr.mxu0 0.0
        %474 = vmatpush1.xpose.msra.mxu0 0.0
        %475 = vmatprep.subr.mxu0 0.0
        %476 = vmatpush1.xpose.msra.mxu0 0.0
        %477 = vmatprep.subr.mxu0 0.0
        %478 = vmatpush1.xpose.msra.mxu0 0.0
        %479 = vmatprep.subr.mxu0 0.0
        %480 = vmatpush1.xpose.msra.mxu0 0.0
        %481 = vmatprep.mubr.f32.mxu0 0.0
        %482 = vmatmul.mubr.f32.gmra.mrb[0].mxu0 %v412
        %v483 = vpop.f32.mrb[0].mxu0
        %v484 = vadd.f32 0.0, %v483
        %v485 = vpop.f32.mrb[0].mxu0
        %486 = vdwg.mxu0
        %v487 = vmul.f32 %v484, 0.17677669
        %v489 = vlaneseq
        %v490 = vshrl.u32 %v489, 7
        %v491 = vsub.s32 0, %v490
        %v492 = vrot.slane %v322, %v491
        %v494 = vmul.f32 %v487, %v492
        %vm495 = vcmask 64512
        %v496 = vsel %vm495, %v494, -inf
        %497 = vmax.xlane.f32.xlu0 %v496
        %v498 = vpop.xlane.xlu0 %497
        %v499 = vsub.f32 %v494, %v498
        %v500 = vmul.f32 %v499, 1.442695
        %v501 = vpow.pop %v500
        %v502 = vmul.f32 %v501, %v492
        %v503 = vsel %vm495, %v502, 0.0
        %504 = vadd.xlane.f32.xlu0 %v503
        %v505 = vpop.xlane.xlu0 %504
        %v506 = vadd.f32 %v505, 1e-13
        %v507 = vrcp.pop %v506
        %v508 = vmul.f32 %v502, %v507
        %v510 = vsel %vm495, %v508, 0
        %512 = vmatprep.subr.mxu0 0.0
        %513 = vmatpush1.msra.mxu0 %v321
        %514 = vmatprep.subr.mxu0 0.0
        %515 = vmatpush1.msra.mxu0 0.0
        %516 = vmatprep.subr.mxu0 0.0
        %517 = vmatpush1.msra.mxu0 0.0
        %518 = vmatprep.subr.mxu0 0.0
        %519 = vmatpush1.msra.mxu0 0.0
        %520 = vmatprep.subr.mxu0 0.0
        %521 = vmatpush1.msra.mxu0 0.0
        %522 = vmatprep.subr.mxu0 0.0
        %523 = vmatpush1.msra.mxu0 0.0
        %524 = vmatprep.subr.mxu0 0.0
        %525 = vmatpush1.msra.mxu0 0.0
        %526 = vmatprep.subr.mxu0 0.0
        %527 = vmatpush1.msra.mxu0 0.0
        %528 = vmatprep.subr.mxu0 0.0
        %529 = vmatpush1.msra.mxu0 0.0
        %530 = vmatprep.subr.mxu0 0.0
        %531 = vmatpush1.msra.mxu0 0.0
        %532 = vmatprep.subr.mxu0 0.0
        %533 = vmatpush1.msra.mxu0 0.0
        %534 = vmatprep.subr.mxu0 0.0
        %535 = vmatpush1.msra.mxu0 0.0
        %536 = vmatprep.subr.mxu0 0.0
        %537 = vmatpush1.msra.mxu0 0.0
        %538 = vmatprep.subr.mxu0 0.0
        %539 = vmatpush1.msra.mxu0 0.0
        %540 = vmatprep.subr.mxu0 0.0
        %541 = vmatpush1.msra.mxu0 0.0
        %542 = vmatprep.subr.mxu0 0.0
        %543 = vmatpush1.msra.mxu0 0.0
        %544 = vmatprep.subr.mxu0 0.0
        %545 = vmatpush1.msra.mxu0 0.0
        %546 = vmatprep.subr.mxu0 0.0
        %547 = vmatpush1.msra.mxu0 0.0
        %548 = vmatprep.subr.mxu0 0.0
        %549 = vmatpush1.msra.mxu0 0.0
        %550 = vmatprep.subr.mxu0 0.0
        %551 = vmatpush1.msra.mxu0 0.0
        %552 = vmatprep.subr.mxu0 0.0
        %553 = vmatpush1.msra.mxu0 0.0
        %554 = vmatprep.subr.mxu0 0.0
        %555 = vmatpush1.msra.mxu0 0.0
        %556 = vmatprep.subr.mxu0 0.0
        %557 = vmatpush1.msra.mxu0 0.0
        %558 = vmatprep.subr.mxu0 0.0
        %559 = vmatpush1.msra.mxu0 0.0
        %560 = vmatprep.subr.mxu0 0.0
        %561 = vmatpush1.msra.mxu0 0.0
        %562 = vmatprep.subr.mxu0 0.0
        %563 = vmatpush1.msra.mxu0 0.0
        %564 = vmatprep.subr.mxu0 0.0
        %565 = vmatpush1.msra.mxu0 0.0
        %566 = vmatprep.subr.mxu0 0.0
        %567 = vmatpush1.msra.mxu0 0.0
        %568 = vmatprep.subr.mxu0 0.0
        %569 = vmatpush1.msra.mxu0 0.0
        %570 = vmatprep.subr.mxu0 0.0
        %571 = vmatpush1.msra.mxu0 0.0
        %572 = vmatprep.subr.mxu0 0.0
        %573 = vmatpush1.msra.mxu0 0.0
        %574 = vmatprep.subr.mxu0 0.0
        %575 = vmatpush1.msra.mxu0 0.0
        %576 = vmatprep.mubr.f32.mxu0 0.0
        %577 = vmatmul.mubr.f32.gmra.mrb[0].mxu0 %v510
        %v578 = vpop.f32.mrb[0].mxu0
        %v579 = vadd.f32 0.0, %v578
        %v580 = vpop.f32.mrb[0].mxu0
        %581 = vdwg.mxu0
        %v582 = vld [vmem:[#allocation8] sm:$0xff]
        %v583 = vld [vmem:[#allocation8 + $0x8] sm:$0xff]
        %v584 = vld [vmem:[#allocation8 + $0x10] sm:$0xff]
        %v585 = vld [vmem:[#allocation8 + $0x18] sm:$0xff]
        %v586 = vld [vmem:[#allocation8 + $0x20] sm:$0xff]
        %v587 = vld [vmem:[#allocation8 + $0x28] sm:$0xff]
        %v588 = vld [vmem:[#allocation8 + $0x30] sm:$0xff]
        %v589 = vld [vmem:[#allocation8 + $0x38] sm:$0xff]
        %590 = vmatprep.subr.mxu0 0.0
        %591 = vmatpush1.msra.mxu0 %v586
        %592 = vmatprep.subr.mxu0 0.0
        %593 = vmatpush1.msra.mxu0 %v587
        %594 = vmatprep.subr.mxu0 0.0
        %595 = vmatpush1.msra.mxu0 %v588
        %596 = vmatprep.subr.mxu0 0.0
        %597 = vmatpush1.msra.mxu0 %v589
        %598 = vmatprep.subr.mxu0 0.0
        %599 = vmatpush1.msra.mxu0 0.0
        %600 = vmatprep.subr.mxu0 0.0
        %601 = vmatpush1.msra.mxu0 0.0
        %602 = vmatprep.subr.mxu0 0.0
        %603 = vmatpush1.msra.mxu0 0.0
        %604 = vmatprep.subr.mxu0 0.0
        %605 = vmatpush1.msra.mxu0 0.0
        %606 = vmatprep.subr.mxu0 0.0
        %607 = vmatpush1.msra.mxu0 0.0
        %608 = vmatprep.subr.mxu0 0.0
        %609 = vmatpush1.msra.mxu0 0.0
        %610 = vmatprep.subr.mxu0 0.0
        %611 = vmatpush1.msra.mxu0 0.0
        %612 = vmatprep.subr.mxu0 0.0
        %613 = vmatpush1.msra.mxu0 0.0
        %614 = vmatprep.subr.mxu0 0.0
        %615 = vmatpush1.msra.mxu0 0.0
        %616 = vmatprep.subr.mxu0 0.0
        %617 = vmatpush1.msra.mxu0 0.0
        %618 = vmatprep.subr.mxu0 0.0
        %619 = vmatpush1.msra.mxu0 0.0
        %620 = vmatprep.subr.mxu0 0.0
        %621 = vmatpush1.msra.mxu0 0.0
        %622 = vmatprep.subr.mxu0 0.0
        %623 = vmatpush1.msra.mxu0 0.0
        %624 = vmatprep.subr.mxu0 0.0
        %625 = vmatpush1.msra.mxu0 0.0
        %626 = vmatprep.subr.mxu0 0.0
        %627 = vmatpush1.msra.mxu0 0.0
        %628 = vmatprep.subr.mxu0 0.0
        %629 = vmatpush1.msra.mxu0 0.0
        %630 = vmatprep.subr.mxu0 0.0
        %631 = vmatpush1.msra.mxu0 0.0
        %632 = vmatprep.subr.mxu0 0.0
        %633 = vmatpush1.msra.mxu0 0.0
        %634 = vmatprep.subr.mxu0 0.0
        %635 = vmatpush1.msra.mxu0 0.0
        %636 = vmatprep.subr.mxu0 0.0
        %637 = vmatpush1.msra.mxu0 0.0
        %638 = vmatprep.subr.mxu0 0.0
        %639 = vmatpush1.msra.mxu0 0.0
        %640 = vmatprep.subr.mxu0 0.0
        %641 = vmatpush1.msra.mxu0 0.0
        %642 = vmatprep.subr.mxu0 0.0
        %643 = vmatpush1.msra.mxu0 0.0
        %644 = vmatprep.subr.mxu0 0.0
        %645 = vmatpush1.msra.mxu0 0.0
        %646 = vmatprep.subr.mxu0 0.0
        %647 = vmatpush1.msra.mxu0 0.0
        %648 = vmatprep.subr.mxu0 0.0
        %649 = vmatpush1.msra.mxu0 0.0
        %650 = vmatprep.subr.mxu0 0.0
        %651 = vmatpush1.msra.mxu0 0.0
        %652 = vmatprep.subr.mxu0 0.0
        %653 = vmatpush1.msra.mxu0 0.0
        %654 = vmatprep.mubr.f32.mxu0 0.0
        %655 = vmatmul.mubr.f32.gmra.mrb[0].mxu0 %v329
        %v656 = vpop.f32.mrb[0].mxu0
        %v657 = vadd.f32 0.0, %v656
        %v658 = vpop.f32.mrb[0].mxu0
        %659 = vdwg.mxu0
        %v661 = vsel %vm327, %v579, 0
        %663 = vmatprep.subr.mxu0 0.0
        %664 = vmatpush1.msra.mxu0 %v582
        %665 = vmatprep.subr.mxu0 0.0
        %666 = vmatpush1.msra.mxu0 %v583
        %667 = vmatprep.subr.mxu0 0.0
        %668 = vmatpush1.msra.mxu0 %v584
        %669 = vmatprep.subr.mxu0 0.0
        %670 = vmatpush1.msra.mxu0 %v585
        %671 = vmatprep.subr.mxu0 0.0
        %672 = vmatpush1.msra.mxu0 0.0
        %673 = vmatprep.subr.mxu0 0.0
        %674 = vmatpush1.msra.mxu0 0.0
        %675 = vmatprep.subr.mxu0 0.0
        %676 = vmatpush1.msra.mxu0 0.0
        %677 = vmatprep.subr.mxu0 0.0
        %678 = vmatpush1.msra.mxu0 0.0
        %679 = vmatprep.subr.mxu0 0.0
        %680 = vmatpush1.msra.mxu0 0.0
        %681 = vmatprep.subr.mxu0 0.0
        %682 = vmatpush1.msra.mxu0 0.0
        %683 = vmatprep.subr.mxu0 0.0
        %684 = vmatpush1.msra.mxu0 0.0
        %685 = vmatprep.subr.mxu0 0.0
        %686 = vmatpush1.msra.mxu0 0.0
        %687 = vmatprep.subr.mxu0 0.0
        %688 = vmatpush1.msra.mxu0 0.0
        %689 = vmatprep.subr.mxu0 0.0
        %690 = vmatpush1.msra.mxu0 0.0
        %691 = vmatprep.subr.mxu0 0.0
        %692 = vmatpush1.msra.mxu0 0.0
        %693 = vmatprep.subr.mxu0 0.0
        %694 = vmatpush1.msra.mxu0 0.0
        %695 = vmatprep.subr.mxu0 0.0
        %696 = vmatpush1.msra.mxu0 0.0
        %697 = vmatprep.subr.mxu0 0.0
        %698 = vmatpush1.msra.mxu0 0.0
        %699 = vmatprep.subr.mxu0 0.0
        %700 = vmatpush1.msra.mxu0 0.0
        %701 = vmatprep.subr.mxu0 0.0
        %702 = vmatpush1.msra.mxu0 0.0
        %703 = vmatprep.subr.mxu0 0.0
        %704 = vmatpush1.msra.mxu0 0.0
        %705 = vmatprep.subr.mxu0 0.0
        %706 = vmatpush1.msra.mxu0 0.0
        %707 = vmatprep.subr.mxu0 0.0
        %708 = vmatpush1.msra.mxu0 0.0
        %709 = vmatprep.subr.mxu0 0.0
        %710 = vmatpush1.msra.mxu0 0.0
        %711 = vmatprep.subr.mxu0 0.0
        %712 = vmatpush1.msra.mxu0 0.0
        %713 = vmatprep.subr.mxu0 0.0
        %714 = vmatpush1.msra.mxu0 0.0
        %715 = vmatprep.subr.mxu0 0.0
        %716 = vmatpush1.msra.mxu0 0.0
        %717 = vmatprep.subr.mxu0 0.0
        %718 = vmatpush1.msra.mxu0 0.0
        %719 = vmatprep.subr.mxu0 0.0
        %720 = vmatpush1.msra.mxu0 0.0
        %721 = vmatprep.subr.mxu0 0.0
        %722 = vmatpush1.msra.mxu0 0.0
        %723 = vmatprep.subr.mxu0 0.0
        %724 = vmatpush1.msra.mxu0 0.0
        %725 = vmatprep.subr.mxu0 0.0
        %726 = vmatpush1.msra.mxu0 0.0
        %727 = vmatprep.mubr.f32.mxu0 0.0
        %728 = vmatmul.mubr.f32.gmra.mrb[0].mxu0 %v661
        %v729 = vpop.f32.mrb[0].mxu0
        %v730 = vadd.f32 %v657, %v729
        %v731 = vpop.f32.mrb[0].mxu0
        %732 = vdwg.mxu0
        %v733 = vxor.u32 %v730, 2147483648
        %v734 = vmul.f32 %v733, 1.442695
        %v735 = vpow.pop %v734
        %v736 = vadd.f32 %v735, 1.0
        %v737 = vrcp.pop %v736
        %v738 = vmul.f32 1.0, %v737
        %v739 = vmul.f32 %v579, %v738
        %740 = vst.msk [vmem:[%s316] sm:$0xff] %vm327, %v739
        %742 = vrot.lane.b32.xlu0 %v738, 96
        %v743 = vpop.permute.xlu0 %742
        %v745 = vmul.f32 %v320, %v743
        %747 = vrot.lane.b32.xlu0 %v745, 32
        %v748 = vpop.permute.xlu0 %747
        %vm750 = vcmask 523520
        %751 = vst.msk [vmem:[%s316] sm:$0xff] %vm750, %v748
        %s752 = sand.u32 %s154, 1
        %s753 = scalar_lea.sflag [#allocation4], %s752
        %s754 = sand.u32 %s154, 1
        %s755 = smul.addr %s754, 8
        %s756 = scalar_lea.vmem [#allocation10], %s755
        // Predicated region
        $region57: #{tpu_custom_call.1} parent=39 // pred_check
          %p757 = pneg %p164
        $region58: #{tpu_custom_call.1} parent=39 // pred_check_branch
          %759 = sbr.rel (%p757) target = $region60
        $region59: #{tpu_custom_call.1} parent=39 // pred_region
          %s761 = ssub.s32 128, 128
          %762 = vsyncadd %s753, %s761
          %s763 = smul.addr %s26, 128
          %s764 = scalar_lea.hbm %s5, %s763
          %s766 = sshll.u32 %s756, 4
          %s767 = int_to_ptr.vmem [resolvable:$true] %s766
          %769 = dma.vmem_to_hbm [thread:$0]  %s767, 128, %s764, %s753
        $region60: #{tpu_custom_call.1} parent=39 // pred_fallthru
          _
      $region40: #{tpu_custom_call.1} parent=5 // pred_fallthru
        _
      %p770 = scmp.le.s32.totalorder 2, %s21
      // Predicated region
      $region61: #{tpu_custom_call.1} parent=5 // pred_check
        %p771 = pneg %p770
      $region62: #{tpu_custom_call.1} parent=5 // pred_check_branch
        %773 = sbr.rel (%p771) target = $region64
      $region63: #{tpu_custom_call.1} parent=5 // pred_region
        %s774 = ssub.s32 %s21, 2
        // Predicated region
        $region65: #{tpu_custom_call.1} parent=63 // pred_check
          %p775 = pneg %p170
        $region66: #{tpu_custom_call.1} parent=63 // pred_check_branch
          %777 = sbr.rel (%p775) target = $region68
        $region67: #{tpu_custom_call.1} parent=63 // pred_region
          %s778 = sand.u32 %s155, 1
          %s779 = scalar_lea.sflag [#allocation4], %s778
          %s780 = sand.u32 %s155, 1
          %s781 = smul.addr %s780, 8
          %s782 = scalar_lea.vmem [#allocation10], %s781
          %783 = dma.done %s779, 128
        $region68: #{tpu_custom_call.1} parent=63 // pred_fallthru
          _
      $region64: #{tpu_custom_call.1} parent=5 // pred_fallthru
        _
    $region6: #{tpu_custom_call.1} parent=1 // loop_footer
      %s25 = sadd.s32 1, %s21
    $region7: #{tpu_custom_call.1} parent=1 // loop_footer_branch
      %20 = sbr.rel target = $region3
    $region8: #{tpu_custom_call.1} parent=1 // loop_exit
      _
    %784 = vsyncpa [#allocation3], 1
    %s785 = scalar_lea.sflag [#allocation3], 1
    %786 = vsyncpa %s785, 1
    %787 = vsyncpa [#allocation6], 1
    %s788 = scalar_lea.sflag [#allocation6], 1
    %789 = vsyncpa %s788, 1
    %790 = vsyncpa [#allocation9], 1
    %791 = vsyncpa [#allocation4], 1
    %s792 = scalar_lea.sflag [#allocation4], 1
    %793 = vsyncpa %s792, 1

</llo_original>
